<compile_context>
chip_gen: v7x
topology: tpu7x:2x2x1
jax: 0.10.0
libtpu: 0.0.40
codegen_flags: <defaults>
</compile_context>

<pallas_src>
import jax
import jax.numpy as jnp
from jax.experimental import pallas as pl
from jax.experimental.pallas import tpu as pltpu


def _ffn_kernel(x_ref, w1_ref, b1_ref, w2_ref, b2_ref, o_ref, acc_ref):
    # x_ref : (tm, d_model)      current token tile
    # w1_ref: (d_model, th)      fc1 weight chunk,  b1_ref: (1, th)
    # w2_ref: (th, d_model)      fc2 weight chunk,  b2_ref: (1, d_model)
    # acc_ref: (tm, d_model) f32 accumulator scratch (persists across h steps)
    h = pl.program_id(1)

    @pl.when(h == 0)
    def _():
        acc_ref[...] = jnp.zeros_like(acc_ref)

    # fc1 chunk on the MXU with f32 accumulation, then bias + ReLU in f32.
    a = jnp.dot(x_ref[...], w1_ref[...], preferred_element_type=jnp.float32)
    a = jnp.maximum(a + b1_ref[...].astype(jnp.float32), 0.0)

    # fc2 partial product, accumulated in f32 VMEM.
    acc_ref[...] += jnp.dot(a.astype(w2_ref.dtype), w2_ref[...],
                            preferred_element_type=jnp.float32)

    # Finalize once per output tile: add bias2, cast, lane-dense store.
    @pl.when(h == pl.num_programs(1) - 1)
    def _():
        o_ref[...] = (acc_ref[...]
                      + b2_ref[...].astype(jnp.float32)).astype(o_ref.dtype)


def _round_up(x, m):
    return ((x + m - 1) // m) * m


def _pick_tm(M, dtype, target=256):
    """Row tile: full extent if small, else `target` rounded to sublane packing."""
    if M <= target:
        return M
    align = 16 if dtype == jnp.bfloat16 else 8
    return _round_up(target, align)


def _pick_th(d_mlp, target=512):
    """Hidden tile: largest multiple of 128 <= target that divides d_MLP.

    th must divide d_MLP exactly so the reduction axis never reads a padded
    weight block (which would corrupt the accumulator)."""
    if d_mlp % 128 != 0:
        return d_mlp
    th = 128
    cand = 128
    while cand <= min(target, d_mlp):
        if d_mlp % cand == 0:
            th = cand
        cand += 128
    return th


def feed_forward(x, w1, b1, w2, b2, *, tm=None, th=None):
    """Fused FFN: fc2(relu(fc1(x))).  x: (..., d_model); returns same shape."""
    orig_shape = x.shape
    d_model = orig_shape[-1]
    x2d = x.reshape(-1, d_model)
    M = x2d.shape[0]
    d_mlp = w1.shape[1]

    if tm is None:
        tm = _pick_tm(M, x.dtype)
    if th is None:
        th = _pick_th(d_mlp)
    assert d_mlp % th == 0, "hidden tile th must divide d_MLP (reduction axis)"

    grid = (pl.cdiv(M, tm), d_mlp // th)

    # VMEM footprint: double-buffered streaming blocks + f32 accumulator.
    in_b = jnp.dtype(x.dtype).itemsize
    w_b = jnp.dtype(w1.dtype).itemsize
    vmem_bytes = (2 * tm * d_model * in_b                    # x tile
                  + 2 * (d_model * th + th) * w_b            # W1 + b1 chunks
                  + 2 * (th * d_model + d_model) * w_b       # W2 chunk + b2
                  + 2 * tm * d_model * in_b                  # out tile
                  + tm * d_model * 4)                        # f32 accumulator
    # Explicit scoped-VMEM budget; capped under v7x's 64 MiB physical VMEM.
    vmem_limit = int(min(max(2 * vmem_bytes, 32 * 1024 * 1024),
                         48 * 1024 * 1024))

    n_m_tiles = grid[0]
    flops = 4 * M * d_model * d_mlp  # two matmuls, 2 flops per MAC
    bytes_accessed = (M * d_model * in_b * 2                 # read x, write y
                      + n_m_tiles * (2 * d_model * d_mlp + d_mlp + d_model) * w_b)

    out = pl.pallas_call(
        _ffn_kernel,
        out_shape=jax.ShapeDtypeStruct((M, d_model), x.dtype),
        grid_spec=pltpu.PrefetchScalarGridSpec(
            num_scalar_prefetch=0,
            grid=grid,
            in_specs=[
                pl.BlockSpec((tm, d_model), lambda i, h: (i, 0)),   # x tile
                pl.BlockSpec((d_model, th), lambda i, h: (0, h)),   # W1 chunk
                pl.BlockSpec((1, th), lambda i, h: (0, h)),         # b1 chunk
                pl.BlockSpec((th, d_model), lambda i, h: (h, 0)),   # W2 chunk
                pl.BlockSpec((1, d_model), lambda i, h: (0, 0)),    # b2
            ],
            out_specs=pl.BlockSpec((tm, d_model), lambda i, h: (i, 0)),
            scratch_shapes=[pltpu.VMEM((tm, d_model), jnp.float32)],
        ),
        compiler_params=pltpu.CompilerParams(
            dimension_semantics=("parallel", "arbitrary"),
            vmem_limit_bytes=vmem_limit),
        cost_estimate=pl.CostEstimate(flops=int(flops), transcendentals=0,
                                      bytes_accessed=int(bytes_accessed)),
    )(x2d, w1, b1, w2, b2)

    return out.reshape(orig_shape)


def init_params(key, d_model, d_mlp, dtype=jnp.float32):
    """Deterministic init mimicking nn.Linear's U(-1/sqrt(fan_in), 1/sqrt(fan_in))."""
    k1, k2, k3, k4 = jax.random.split(key, 4)
    lim1 = 1.0 / jnp.sqrt(d_model)
    lim2 = 1.0 / jnp.sqrt(d_mlp)
    # stored transposed vs. nn.Linear.weight so the kernel does x @ W
    w1 = jax.random.uniform(k1, (d_model, d_mlp), dtype, -lim1, lim1)
    b1 = jax.random.uniform(k2, (1, d_mlp), dtype, -lim1, lim1)
    w2 = jax.random.uniform(k3, (d_mlp, d_model), dtype, -lim2, lim2)
    b2 = jax.random.uniform(k4, (1, d_model), dtype, -lim2, lim2)
    return w1, b1, w2, b2


if __name__ == "__main__":
    key = jax.random.PRNGKey(0)
    # Small but TPU-friendly shapes: d_model is a multiple of 128 (lane-dense
    # output stores); M = batch*seq = 256 with tm=128 -> 2 row tiles, and
    # d_MLP = 512 with th=256 -> 2 hidden tiles, so both the pipelined grid
    # and the accumulator / finalize path are exercised.
    batch, seq, d_model, d_mlp = 2, 128, 128, 512

    kx, kp = jax.random.split(key)
    x = jax.random.normal(kx, (batch, seq, d_model), dtype=jnp.float32)
    w1, b1, w2, b2 = init_params(kp, d_model, d_mlp, dtype=jnp.float32)

    # Pure-JAX reference (matches the PyTorch module with dropout=None).
    ref = jnp.maximum(x @ w1 + b1[0], 0.0) @ w2 + b2[0]

    # f32 path.
    y = feed_forward(x, w1, b1, w2, b2, tm=128, th=256)
    y = jax.block_until_ready(y)
    assert y.shape == x.shape
    assert jnp.allclose(y, ref, atol=1e-4, rtol=1e-4), "f32 mismatch vs reference"

    # bf16 fast path (MXU-native on v6e/v7x): bf16 matmul inputs, f32 accum.
    xb = x.astype(jnp.bfloat16)
    w1b, b1b, w2b, b2b = (t.astype(jnp.bfloat16) for t in (w1, b1, w2, b2))
    yb = feed_forward(xb, w1b, b1b, w2b, b2b, tm=128, th=256)
    yb = jax.block_until_ready(yb)
    assert yb.shape == x.shape
    assert jnp.allclose(yb.astype(jnp.float32), ref, atol=0.1, rtol=5e-2), \
        "bf16 mismatch vs reference"

    print("KERNEL_OK")
</pallas_src>

<mosaic_0001>
module attributes {stable_mosaic.version = 11 : i64} {
  func.func @_ffn_kernel(%arg0: i32, %arg1: i32, %arg2: memref<128x128xf32, #tpu.memory_space<vmem>>, %arg3: memref<128x256xf32, #tpu.memory_space<vmem>>, %arg4: memref<1x256xf32, #tpu.memory_space<vmem>>, %arg5: memref<256x128xf32, #tpu.memory_space<vmem>>, %arg6: memref<1x128xf32, #tpu.memory_space<vmem>>, %arg7: memref<128x128xf32, #tpu.memory_space<vmem>>, %arg8: memref<128x128xf32, #tpu.memory_space<vmem>>) attributes {dimension_semantics = [#tpu.dimension_semantics<parallel>, #tpu.dimension_semantics<arbitrary>], iteration_bounds = array<i64: 2, 2>, scalar_prefetch = 0 : i64, scratch_operands = 1 : i64, tpu.core_type = #tpu.core_type<tc>, window_params = [{transform_indices = @transform_0, window_bounds = array<i64: 128, 128>}, {transform_indices = @transform_1, window_bounds = array<i64: 128, 256>}, {transform_indices = @transform_2, window_bounds = array<i64: 1, 256>}, {transform_indices = @transform_3, window_bounds = array<i64: 256, 128>}, {pipeline_mode = #tpu.pipeline_mode<synchronous>, transform_indices = @transform_4, window_bounds = array<i64: 1, 128>}, {transform_indices = @transform_5, window_bounds = array<i64: 128, 128>}]} {
    %c0_i32 = arith.constant 0 : i32
    %0 = arith.cmpi eq, %arg1, %c0_i32 : i32
    %1 = arith.extui %0 : i1 to i32
    %c0_i32_0 = arith.constant 0 : i32
    %2 = arith.cmpi ne, %1, %c0_i32_0 : i32
    scf.if %2 {
      %cst_15 = arith.constant 0.000000e+00 : f32
      %19 = vector.broadcast %cst_15 : f32 to vector<128x128xf32>
      %c0_16 = arith.constant 0 : index
      %c0_17 = arith.constant 0 : index
      %20 = vector.load %arg8[%c0_16, %c0_17] : memref<128x128xf32, #tpu.memory_space<vmem>>, vector<128x128xf32>
      tpu.vector_store %arg8[%c0_16, %c0_17], %19 {strides = array<i32>} : memref<128x128xf32, #tpu.memory_space<vmem>>, vector<128x128xf32>,
    } else {
    }
    %c0 = arith.constant 0 : index
    %c0_1 = arith.constant 0 : index
    %3 = vector.load %arg2[%c0, %c0_1] : memref<128x128xf32, #tpu.memory_space<vmem>>, vector<128x128xf32>
    %c0_2 = arith.constant 0 : index
    %c0_3 = arith.constant 0 : index
    %4 = vector.load %arg3[%c0_2, %c0_3] : memref<128x256xf32, #tpu.memory_space<vmem>>, vector<128x256xf32>
    %cst = arith.constant dense<0.000000e+00> : vector<128x256xf32>
    %5 = tpu.matmul %3, %4, %cst {dimension_numbers = #tpu.dot_dimension_numbers<[1], [0], [0], [1], [0, 0, 1, 1], [], []>} : vector<128x128xf32>, vector<128x256xf32>, vector<128x256xf32> -> vector<128x256xf32>
    %c0_4 = arith.constant 0 : index
    %c0_5 = arith.constant 0 : index
    %6 = vector.load %arg4[%c0_4, %c0_5] : memref<1x256xf32, #tpu.memory_space<vmem>>, vector<1x256xf32>
    %7 = vector.broadcast %6 : vector<1x256xf32> to vector<128x256xf32>
    %8 = arith.addf %5, %7 : vector<128x256xf32>
    %cst_6 = arith.constant 0.000000e+00 : f32
    %9 = vector.broadcast %cst_6 : f32 to vector<128x256xf32>
    %10 = arith.maximumf %8, %9 : vector<128x256xf32>
    %c0_7 = arith.constant 0 : index
    %c0_8 = arith.constant 0 : index
    %11 = vector.load %arg8[%c0_7, %c0_8] : memref<128x128xf32, #tpu.memory_space<vmem>>, vector<128x128xf32>
    %c0_9 = arith.constant 0 : index
    %c0_10 = arith.constant 0 : index
    %12 = vector.load %arg5[%c0_9, %c0_10] : memref<256x128xf32, #tpu.memory_space<vmem>>, vector<256x128xf32>
    %cst_11 = arith.constant dense<0.000000e+00> : vector<128x128xf32>
    %13 = tpu.matmul %10, %12, %cst_11 {dimension_numbers = #tpu.dot_dimension_numbers<[1], [0], [0], [1], [0, 0, 1, 1], [], []>} : vector<128x256xf32>, vector<256x128xf32>, vector<128x128xf32> -> vector<128x128xf32>
    %14 = arith.addf %11, %13 : vector<128x128xf32>
    %c0_12 = arith.constant 0 : index
    %c0_13 = arith.constant 0 : index
    %15 = vector.load %arg8[%c0_12, %c0_13] : memref<128x128xf32, #tpu.memory_space<vmem>>, vector<128x128xf32>
    tpu.vector_store %arg8[%c0_12, %c0_13], %14 {strides = array<i32>} : memref<128x128xf32, #tpu.memory_space<vmem>>, vector<128x128xf32>,
    %c1_i32 = arith.constant 1 : i32
    %16 = arith.cmpi eq, %arg1, %c1_i32 : i32
    %17 = arith.extui %16 : i1 to i32
    %c0_i32_14 = arith.constant 0 : i32
    %18 = arith.cmpi ne, %17, %c0_i32_14 : i32
    scf.if %18 {
      %c0_15 = arith.constant 0 : index
      %c0_16 = arith.constant 0 : index
      %19 = vector.load %arg8[%c0_15, %c0_16] : memref<128x128xf32, #tpu.memory_space<vmem>>, vector<128x128xf32>
      %c0_17 = arith.constant 0 : index
      %c0_18 = arith.constant 0 : index
      %20 = vector.load %arg6[%c0_17, %c0_18] : memref<1x128xf32, #tpu.memory_space<vmem>>, vector<1x128xf32>
      %21 = vector.broadcast %20 : vector<1x128xf32> to vector<128x128xf32>
      %22 = arith.addf %19, %21 : vector<128x128xf32>
      %c0_19 = arith.constant 0 : index
      %c0_20 = arith.constant 0 : index
      %23 = vector.load %arg7[%c0_19, %c0_20] : memref<128x128xf32, #tpu.memory_space<vmem>>, vector<128x128xf32>
      tpu.vector_store %arg7[%c0_19, %c0_20], %22 {strides = array<i32>} : memref<128x128xf32, #tpu.memory_space<vmem>>, vector<128x128xf32>,
    } else {
    }
    return
  }
  func.func @transform_0(%arg0: i32, %arg1: i32) -> (i32, i32) {
    %c0_i32 = arith.constant 0 : i32
    %c0_i32_0 = arith.constant 0 : i32
    return %arg0, %c0_i32 : i32, i32
  }
  func.func @transform_1(%arg0: i32, %arg1: i32) -> (i32, i32) {
    %c0_i32 = arith.constant 0 : i32
    %c0_i32_0 = arith.constant 0 : i32
    return %c0_i32, %arg1 : i32, i32
  }
  func.func @transform_2(%arg0: i32, %arg1: i32) -> (i32, i32) {
    %c0_i32 = arith.constant 0 : i32
    %c0_i32_0 = arith.constant 0 : i32
    return %c0_i32, %arg1 : i32, i32
  }
  func.func @transform_3(%arg0: i32, %arg1: i32) -> (i32, i32) {
    %c0_i32 = arith.constant 0 : i32
    %c0_i32_0 = arith.constant 0 : i32
    return %arg1, %c0_i32 : i32, i32
  }
  func.func @transform_4(%arg0: i32, %arg1: i32) -> (i32, i32) {
    %c0_i32 = arith.constant 0 : i32
    %c0_i32_0 = arith.constant 0 : i32
    %c0_i32_1 = arith.constant 0 : i32
    return %c0_i32, %c0_i32_0 : i32, i32
  }
  func.func @transform_5(%arg0: i32, %arg1: i32) -> (i32, i32) {
    %c0_i32 = arith.constant 0 : i32
    %c0_i32_0 = arith.constant 0 : i32
    return %arg0, %c0_i32 : i32, i32
  }
}

</mosaic_0001>

<llo_original>
// kernel: tpu_custom_call.1
$region0: #{tpu_custom_call.1}
  #allocation0 [shape = 'u32[]', space=smem, size = 0x4, offset = 0x4, fixed_abs, tag = 'smem constant byte address 0x4 - core index']
  #allocation1 [shape = 'u32[144,128]{1,0:T(1,128)}', space=vmem, size = 0x12000, scoped, tag = 'internal scratch']
  #allocation2 [shape = 'f32[128,128]{1,0:T(8,128)}', space=vmem, size = 0x10000, scoped, tag = 'scratch operand']
  %s0 = inlined_call_operand.hbm [shape: f32[256,128], index: 0, kind: input, shape index: {}]
  %s1 = inlined_call_operand.hbm [shape: f32[128,512], index: 1, kind: input, shape index: {}]
  %s2 = inlined_call_operand.vmem [shape: f32[1,512], index: 2, kind: input, shape index: {}]
  %s3 = inlined_call_operand.hbm [shape: f32[512,128], index: 3, kind: input, shape index: {}]
  %s4 = inlined_call_operand.vmem [shape: f32[1,128], index: 4, kind: input, shape index: {}]
  %s5 = inlined_call_operand.hbm [shape: f32[256,128], index: 5, kind: output, shape index: {}]
  %s6 = sld [smem:[#allocation0]]
  $region73: #{tpu_custom_call.1} parent=0
    _
  %s8 = ssub.s32 1, %s6
  %s9 = scalar_select 0, %s8, %s6
  $region1: #{tpu_custom_call.1} parent=0
    #allocation3 [shape = 'u8[131072]{0}', space=vmem, size = 0x20000, scoped, tag = 'input window, operand 0']
    #allocation4 [shape = 's32[2]{0}', space=sflag, size = 0x8, scoped, tag = 'scoped memory for tpu_custom_call.1']
    #allocation5 [shape = 's32[2]{0}', space=sflag, size = 0x8, scoped, tag = 'scoped memory for tpu_custom_call.1']
    #allocation6 [shape = 'u8[262144]{0}', space=vmem, size = 0x40000, scoped, tag = 'input window, operand 1']
    #allocation7 [shape = 's32[2]{0}', space=sflag, size = 0x8, scoped, tag = 'scoped memory for tpu_custom_call.1']
    #allocation8 [shape = 'u8[262144]{0}', space=vmem, size = 0x40000, scoped, tag = 'input window, operand 3']
    #allocation9 [shape = 'u8[131072]{0}', space=vmem, size = 0x20000, scoped, tag = 'output window, operand 0']
    %10 = vsyncpa [#allocation4], 0
    %s11 = scalar_lea.sflag [#allocation4], 1
    %12 = vsyncpa %s11, 0
    %13 = vsyncpa [#allocation7], 0
    %s14 = scalar_lea.sflag [#allocation7], 1
    %15 = vsyncpa %s14, 0
    %16 = vsyncpa [#allocation5], 0
    %s17 = scalar_lea.sflag [#allocation5], 1
    %18 = vsyncpa %s17, 0
    loop: start=0, step=1, limit=6
    $region2: #{tpu_custom_call.1} parent=1 // loop_pre_header
      _
    $region3: #{tpu_custom_call.1} parent=1 // loop_header
      %s20 = sphi 0, %s24
      %p21 = scmp.ge.s32.totalorder %s20, 6
      %s27 = sphi 0, %s39
      %s28 = sphi 0, %s35
      %s29 = sphi 0, %s27
      %s30 = sphi 0, %s28
      %s31 = sphi 0, %s29
      %s32 = sphi 0, %s30
      %s42 = sphi 0, %s44
      %s45 = sphi 0, %s42
      %s46 = sphi 0, %s45
      %s62 = sphi 0, %s46
      %s68 = sphi 0, %s70
      %s71 = sphi 0, %s68
      %s72 = sphi 0, %s71
      %s88 = sphi 0, %s72
      %s94 = sphi 0, %s96
      %s97 = sphi 0, %s94
      %s98 = sphi 0, %s97
      %s114 = sphi 0, %s98
      %s120 = sphi 0, %s122
      %s123 = sphi 0, %s120
      %s124 = sphi 0, %s123
      %s140 = sphi 0, %s124
      %s144 = sphi 0, %s144
      %s146 = sphi 0, %s144
      %s147 = sphi 0, %s146
      %s161 = sphi 0, %s147
      %s167 = sphi 0, %s169
      %s170 = sphi 0, %s167
      %s171 = sphi 0, %s170
      %s187 = sphi 0, %s171
    $region4: #{tpu_custom_call.1} parent=1 // loop_header_branch
      %23 = sbr.rel (%p21) target = $region8
    $region5: #{tpu_custom_call.1} parent=1 // loop_body
      %s25 = ssub.s32 %s20, 1
      %s26 = ssub.s32 %s20, 2
      %s33 = sadd.s32 1, %s28
      %p34 = scmp.ge.s32.totalorder %s33, 2
      %s35 = scalar_select %p34, 0, %s33
      %s36 = sadd.s32 1, %s27
      %s37 = scalar_select %p34, %s36, %s27
      %p38 = scmp.ge.s32.totalorder %s37, 2
      %s39 = scalar_select %p38, 0, %s37
      %s40 = ssub.s32 %s27, %s39
      %p41 = scmp.eq.s32.totalorder %s40, 0
      %s43 = sadd.s32 %s42, 1
      %s44 = scalar_select %p41, %s42, %s43
      %p47 = pneg %p41
      %p48 = scmp.eq.s32.totalorder %s20, 3
      %p49 = por %p47, %p48
      %p50 = scmp.ne.s32.totalorder %s42, %s45
      %p51 = scmp.eq.s32.totalorder %s20, 0
      %p52 = por %p50, %p51
      %p53 = scmp.ne.s32.totalorder %s42, %s45
      %p54 = scmp.eq.s32.totalorder %s25, 3
      %p55 = por %p53, %p54
      %p56 = scmp.ne.s32.totalorder %s45, %s46
      %p57 = scmp.eq.s32.totalorder %s25, 0
      %p58 = por %p56, %p57
      %p59 = scmp.ne.s32.totalorder %s45, %s46
      %p60 = scmp.eq.s32.totalorder %s26, 3
      %p61 = por %p59, %p60
      %p63 = scmp.ne.s32.totalorder %s46, %s62
      %p64 = scmp.eq.s32.totalorder %s26, 0
      %p65 = por %p63, %p64
      %s66 = ssub.s32 %s28, %s35
      %p67 = scmp.eq.s32.totalorder %s66, 0
      %s69 = sadd.s32 %s68, 1
      %s70 = scalar_select %p67, %s68, %s69
      %p73 = pneg %p67
      %p74 = scmp.eq.s32.totalorder %s20, 3
      %p75 = por %p73, %p74
      %p76 = scmp.ne.s32.totalorder %s68, %s71
      %p77 = scmp.eq.s32.totalorder %s20, 0
      %p78 = por %p76, %p77
      %p79 = scmp.ne.s32.totalorder %s68, %s71
      %p80 = scmp.eq.s32.totalorder %s25, 3
      %p81 = por %p79, %p80
      %p82 = scmp.ne.s32.totalorder %s71, %s72
      %p83 = scmp.eq.s32.totalorder %s25, 0
      %p84 = por %p82, %p83
      %p85 = scmp.ne.s32.totalorder %s71, %s72
      %p86 = scmp.eq.s32.totalorder %s26, 3
      %p87 = por %p85, %p86
      %p89 = scmp.ne.s32.totalorder %s72, %s88
      %p90 = scmp.eq.s32.totalorder %s26, 0
      %p91 = por %p89, %p90
      %s92 = ssub.s32 %s28, %s35
      %p93 = scmp.eq.s32.totalorder %s92, 0
      %s95 = sadd.s32 %s94, 1
      %s96 = scalar_select %p93, %s94, %s95
      %p99 = pneg %p93
      %p100 = scmp.eq.s32.totalorder %s20, 3
      %p101 = por %p99, %p100
      %p102 = scmp.ne.s32.totalorder %s94, %s97
      %p103 = scmp.eq.s32.totalorder %s20, 0
      %p104 = por %p102, %p103
      %p105 = scmp.ne.s32.totalorder %s94, %s97
      %p106 = scmp.eq.s32.totalorder %s25, 3
      %p107 = por %p105, %p106
      %p108 = scmp.ne.s32.totalorder %s97, %s98
      %p109 = scmp.eq.s32.totalorder %s25, 0
      %p110 = por %p108, %p109
      %p111 = scmp.ne.s32.totalorder %s97, %s98
      %p112 = scmp.eq.s32.totalorder %s26, 3
      %p113 = por %p111, %p112
      %p115 = scmp.ne.s32.totalorder %s98, %s114
      %p116 = scmp.eq.s32.totalorder %s26, 0
      %p117 = por %p115, %p116
      %s118 = ssub.s32 %s28, %s35
      %p119 = scmp.eq.s32.totalorder %s118, 0
      %s121 = sadd.s32 %s120, 1
      %s122 = scalar_select %p119, %s120, %s121
      %p125 = pneg %p119
      %p126 = scmp.eq.s32.totalorder %s20, 3
      %p127 = por %p125, %p126
      %p128 = scmp.ne.s32.totalorder %s120, %s123
      %p129 = scmp.eq.s32.totalorder %s20, 0
      %p130 = por %p128, %p129
      %p131 = scmp.ne.s32.totalorder %s120, %s123
      %p132 = scmp.eq.s32.totalorder %s25, 3
      %p133 = por %p131, %p132
      %p134 = scmp.ne.s32.totalorder %s123, %s124
      %p135 = scmp.eq.s32.totalorder %s25, 0
      %p136 = por %p134, %p135
      %p137 = scmp.ne.s32.totalorder %s123, %s124
      %p138 = scmp.eq.s32.totalorder %s26, 3
      %p139 = por %p137, %p138
      %p141 = scmp.ne.s32.totalorder %s124, %s140
      %p142 = scmp.eq.s32.totalorder %s26, 0
      %p143 = por %p141, %p142
      %s145 = sadd.s32 %s144, 1
      %p148 = scmp.eq.s32.totalorder %s20, 3
      %p149 = scmp.ne.s32.totalorder %s144, %s146
      %p150 = scmp.eq.s32.totalorder %s20, 0
      %p151 = por %p149, %p150
      %p152 = scmp.ne.s32.totalorder %s144, %s146
      %p153 = scmp.eq.s32.totalorder %s25, 3
      %p154 = por %p152, %p153
      %p155 = scmp.ne.s32.totalorder %s146, %s147
      %p156 = scmp.eq.s32.totalorder %s25, 0
      %p157 = por %p155, %p156
      %p158 = scmp.ne.s32.totalorder %s146, %s147
      %p159 = scmp.eq.s32.totalorder %s26, 3
      %p160 = por %p158, %p159
      %p162 = scmp.ne.s32.totalorder %s147, %s161
      %p163 = scmp.eq.s32.totalorder %s26, 0
      %p164 = por %p162, %p163
      %s165 = ssub.s32 %s27, %s39
      %p166 = scmp.eq.s32.totalorder %s165, 0
      %s168 = sadd.s32 %s167, 1
      %s169 = scalar_select %p166, %s167, %s168
      %p172 = pneg %p166
      %p173 = scmp.eq.s32.totalorder %s20, 3
      %p174 = por %p172, %p173
      %p175 = scmp.ne.s32.totalorder %s167, %s170
      %p176 = scmp.eq.s32.totalorder %s20, 0
      %p177 = por %p175, %p176
      %p178 = scmp.ne.s32.totalorder %s167, %s170
      %p179 = scmp.eq.s32.totalorder %s25, 3
      %p180 = por %p178, %p179
      %p181 = scmp.ne.s32.totalorder %s170, %s171
      %p182 = scmp.eq.s32.totalorder %s25, 0
      %p183 = por %p181, %p182
      %p184 = scmp.ne.s32.totalorder %s170, %s171
      %p185 = scmp.eq.s32.totalorder %s26, 3
      %p186 = por %p184, %p185
      %p188 = scmp.ne.s32.totalorder %s171, %s187
      %p189 = scmp.eq.s32.totalorder %s26, 0
      %p190 = por %p188, %p189
      %p191 = scmp.le.s32.totalorder 1, %s20
      %p192 = scmp.lt.s32.totalorder %s20, 5
      %p193 = pnand %p191, %p192
      %p194 = pneg %p193
      // Predicated region
      $region9: #{tpu_custom_call.1} parent=5 // pred_check
        _
      $region10: #{tpu_custom_call.1} parent=5 // pred_check_branch
        %196 = sbr.rel (%p193) target = $region12
      $region11: #{tpu_custom_call.1} parent=5 // pred_region
        %s197 = ssub.s32 %s20, 1
        // Predicated region
        $region13: #{tpu_custom_call.1} parent=11 // pred_check
          %p198 = pneg %p157
        $region14: #{tpu_custom_call.1} parent=11 // pred_check_branch
          %200 = sbr.rel (%p198) target = $region16
        $region15: #{tpu_custom_call.1} parent=11 // pred_region
          _
        $region16: #{tpu_custom_call.1} parent=11 // pred_fallthru
          _
      $region12: #{tpu_custom_call.1} parent=5 // pred_fallthru
        _
      %p201 = scmp.lt.s32.totalorder %s20, 4
      // Predicated region
      $region17: #{tpu_custom_call.1} parent=5 // pred_check
        %p202 = pneg %p201
      $region18: #{tpu_custom_call.1} parent=5 // pred_check_branch
        %204 = sbr.rel (%p202) target = $region20
      $region19: #{tpu_custom_call.1} parent=5 // pred_region
        // Predicated region
        $region21: #{tpu_custom_call.1} parent=19 // pred_check
          %p205 = pneg %p52
        $region22: #{tpu_custom_call.1} parent=19 // pred_check_branch
          %207 = sbr.rel (%p205) target = $region24
        $region23: #{tpu_custom_call.1} parent=19 // pred_region
          %s208 = sand.u32 %s42, 1
          %s209 = scalar_lea.sflag [#allocation4], %s208
          %s210 = sand.u32 %s42, 1
          %s211 = smul.addr %s210, 128
          %s212 = scalar_lea.vmem [#allocation3], %s211
          %s213 = smul.u32 16, %s27
          %s215 = ssub.s32 2048, 2048
          %216 = vsyncadd %s209, %s215
          %s217 = smul.addr %s213, 128
          %s218 = scalar_lea.hbm %s0, %s217
          %s219 = sshll.u32 %s212, 4
          %s220 = int_to_ptr.vmem [resolvable:$true] %s219
          %225 = dma.hbm_to_vmem [thread:$0]  %s218, 2048, %s220, %s209, 128, 128, 8
        $region24: #{tpu_custom_call.1} parent=19 // pred_fallthru
          _
        // Predicated region
        $region25: #{tpu_custom_call.1} parent=19 // pred_check
          %p226 = pneg %p78
        $region26: #{tpu_custom_call.1} parent=19 // pred_check_branch
          %228 = sbr.rel (%p226) target = $region28
        $region27: #{tpu_custom_call.1} parent=19 // pred_region
          %s229 = sand.u32 %s20, 1
          %s230 = scalar_lea.sflag [#allocation7], %s229
          %s231 = sand.u32 %s68, 1
          %s232 = smul.addr %s231, 256
          %s233 = scalar_lea.vmem [#allocation6], %s232
          %s234 = smul.u32 2, %s28
          %s236 = ssub.s32 4096, 4096
          %237 = vsyncadd %s230, %s236
          %s238 = smul.addr %s234, 128
          %s239 = scalar_lea.hbm %s1, %s238
          %s240 = sshll.u32 %s233, 4
          %s241 = int_to_ptr.vmem [resolvable:$true] %s240
          %246 = dma.hbm_to_vmem [thread:$0]  %s239, 4096, %s241, %s230, 512, 256, 16
        $region28: #{tpu_custom_call.1} parent=19 // pred_fallthru
          _
        // Predicated region
        $region29: #{tpu_custom_call.1} parent=19 // pred_check
          %p247 = pneg %p104
        $region30: #{tpu_custom_call.1} parent=19 // pred_check_branch
          %249 = sbr.rel (%p247) target = $region32
        $region31: #{tpu_custom_call.1} parent=19 // pred_region
          %s250 = smul.u32 2, %s28
          %p251 = scmp.lt.s32.totalorder %s250, 3
          %s252 = scalar_select %p251, %s250, 3
          %s253 = scalar_lea.vmem %s2, %s252
          %s254 = smul.u32 2, %s28
        $region32: #{tpu_custom_call.1} parent=19 // pred_fallthru
          _
        // Predicated region
        $region33: #{tpu_custom_call.1} parent=19 // pred_check
          %p255 = pneg %p130
        $region34: #{tpu_custom_call.1} parent=19 // pred_check_branch
          %257 = sbr.rel (%p255) target = $region36
        $region35: #{tpu_custom_call.1} parent=19 // pred_region
          %s258 = sand.u32 %s20, 1
          %s259 = scalar_lea.sflag [#allocation7], %s258
          %s260 = sand.u32 %s120, 1
          %s261 = smul.addr %s260, 256
          %s262 = scalar_lea.vmem [#allocation8], %s261
          %s263 = smul.u32 32, %s28
          %s265 = ssub.s32 4096, 4096
          %266 = vsyncadd %s259, %s265
          %s267 = smul.addr %s263, 128
          %s268 = scalar_lea.hbm %s3, %s267
          %s269 = sshll.u32 %s262, 4
          %s270 = int_to_ptr.vmem [resolvable:$true] %s269
          %275 = dma.hbm_to_vmem [thread:$0]  %s268, 4096, %s270, %s259, 128, 128, 8
        $region36: #{tpu_custom_call.1} parent=19 // pred_fallthru
          _
      $region20: #{tpu_custom_call.1} parent=5 // pred_fallthru
        _
      %p276 = scmp.le.s32.totalorder 1, %s20
      %p277 = scmp.lt.s32.totalorder %s20, 5
      %p278 = pnand %p276, %p277
      %p279 = pneg %p278
      // Predicated region
      $region37: #{tpu_custom_call.1} parent=5 // pred_check
        _
      $region38: #{tpu_custom_call.1} parent=5 // pred_check_branch
        %281 = sbr.rel (%p278) target = $region40
      $region39: #{tpu_custom_call.1} parent=5 // pred_region
        %s282 = ssub.s32 %s20, 1
        %s283 = sand.u32 %s45, 1
        %s284 = scalar_lea.sflag [#allocation4], %s283
        %s285 = sand.u32 %s45, 1
        %s286 = smul.addr %s285, 128
        %s287 = scalar_lea.vmem [#allocation3], %s286
        // Predicated region
        $region41: #{tpu_custom_call.1} parent=39 // pred_check
          %p288 = pneg %p58
        $region42: #{tpu_custom_call.1} parent=39 // pred_check_branch
          %290 = sbr.rel (%p288) target = $region44
        $region43: #{tpu_custom_call.1} parent=39 // pred_region
          %291 = dma.done %s284, 2048
        $region44: #{tpu_custom_call.1} parent=39 // pred_fallthru
          _
        %s292 = sand.u32 %s25, 1
        %s293 = scalar_lea.sflag [#allocation7], %s292
        %s294 = sand.u32 %s71, 1
        %s295 = smul.addr %s294, 256
        %s296 = scalar_lea.vmem [#allocation6], %s295
        // Predicated region
        $region45: #{tpu_custom_call.1} parent=39 // pred_check
          %p297 = pneg %p84
        $region46: #{tpu_custom_call.1} parent=39 // pred_check_branch
          %299 = sbr.rel (%p297) target = $region48
        $region47: #{tpu_custom_call.1} parent=39 // pred_region
          %300 = dma.done %s293, 4096
        $region48: #{tpu_custom_call.1} parent=39 // pred_fallthru
          _
        %s301 = sand.u32 %s25, 1
        %s302 = scalar_lea.sflag [#allocation7], %s301
        %s303 = sand.u32 %s123, 1
        %s304 = smul.addr %s303, 256
        %s305 = scalar_lea.vmem [#allocation8], %s304
        // Predicated region
        $region49: #{tpu_custom_call.1} parent=39 // pred_check
          %p306 = pneg %p136
        $region50: #{tpu_custom_call.1} parent=39 // pred_check_branch
          %308 = sbr.rel (%p306) target = $region52
        $region51: #{tpu_custom_call.1} parent=39 // pred_region
          %309 = dma.done %s302, 4096
        $region52: #{tpu_custom_call.1} parent=39 // pred_fallthru
          _
        %s310 = sand.u32 %s45, 1
        %s311 = scalar_lea.sflag [#allocation4], %s310
        %s312 = sand.u32 %s45, 1
        %s313 = smul.addr %s312, 128
        %s314 = scalar_lea.vmem [#allocation3], %s313
        %p315 = pneg %p58
        %p316 = pneg %p55
        %s317 = sand.u32 %s25, 1
        %s318 = scalar_lea.sflag [#allocation7], %s317
        %s319 = sand.u32 %s71, 1
        %s320 = smul.addr %s319, 256
        %s321 = scalar_lea.vmem [#allocation6], %s320
        %p322 = pneg %p84
        %p323 = pneg %p81
        %s324 = smul.u32 2, %s30
        %p325 = scmp.lt.s32.totalorder %s324, 3
        %s326 = scalar_select %p325, %s324, 3
        %s327 = scalar_lea.vmem %s2, %s326
        %p328 = pneg %p110
        %p329 = pneg %p107
        %s330 = sand.u32 %s25, 1
        %s331 = scalar_lea.sflag [#allocation7], %s330
        %s332 = sand.u32 %s123, 1
        %s333 = smul.addr %s332, 256
        %s334 = scalar_lea.vmem [#allocation8], %s333
        %p335 = pneg %p136
        %p336 = pneg %p133
        %p337 = pneg %p157
        %p338 = pneg %p154
        %p339 = pneg %p183
        %p340 = pneg %p180
        %s341 = sand.u32 %s170, 1
        %s342 = scalar_lea.sflag [#allocation5], %s341
        %s343 = sand.u32 %s170, 1
        %s344 = smul.addr %s343, 128
        %s345 = scalar_lea.vmem [#allocation9], %s344
        %s346 = smul.u32 16, %s29
        %s347 = smul.u32 2, %s30
        %s348 = smul.u32 2, %s30
        %p349 = scmp.lt.s32.totalorder %s348, 3
        %s350 = scalar_select %p349, %s348, 3
        %s351 = scalar_lea.vmem %s2, %s350
        %s352 = smul.u32 2, %s30
        %s353 = smul.u32 32, %s30
        %s354 = smul.u32 16, %s29
        %p355 = scmp.eq.s32.totalorder %s30, 0
        // Predicated region
        $region53: #{tpu_custom_call.1} parent=39 // pred_check
          %p356 = pneg %p355
        $region54: #{tpu_custom_call.1} parent=39 // pred_check_branch
          %358 = sbr.rel (%p356) target = $region56
        $region55: #{tpu_custom_call.1} parent=39 // pred_region
          %359 = vst [vmem:[#allocation2] sm:$0xff] 0.0
          %360 = vst [vmem:[#allocation2 + $0x8] sm:$0xff] 0.0
          %361 = vst [vmem:[#allocation2 + $0x10] sm:$0xff] 0.0
          %362 = vst [vmem:[#allocation2 + $0x18] sm:$0xff] 0.0
          %363 = vst [vmem:[#allocation2 + $0x20] sm:$0xff] 0.0
          %364 = vst [vmem:[#allocation2 + $0x28] sm:$0xff] 0.0
          %365 = vst [vmem:[#allocation2 + $0x30] sm:$0xff] 0.0
          %366 = vst [vmem:[#allocation2 + $0x38] sm:$0xff] 0.0
          %367 = vst [vmem:[#allocation2 + $0x40] sm:$0xff] 0.0
          %368 = vst [vmem:[#allocation2 + $0x48] sm:$0xff] 0.0
          %369 = vst [vmem:[#allocation2 + $0x50] sm:$0xff] 0.0
          %370 = vst [vmem:[#allocation2 + $0x58] sm:$0xff] 0.0
          %371 = vst [vmem:[#allocation2 + $0x60] sm:$0xff] 0.0
          %372 = vst [vmem:[#allocation2 + $0x68] sm:$0xff] 0.0
          %373 = vst [vmem:[#allocation2 + $0x70] sm:$0xff] 0.0
          %374 = vst [vmem:[#allocation2 + $0x78] sm:$0xff] 0.0
        $region56: #{tpu_custom_call.1} parent=39 // pred_fallthru
          _
        %v375 = vld [vmem:[%s287] sm:$0xff]
        %v376 = vld [vmem:[%s287 + $0x8] sm:$0xff]
        %v377 = vld [vmem:[%s287 + $0x10] sm:$0xff]
        %v378 = vld [vmem:[%s287 + $0x18] sm:$0xff]
        %v379 = vld [vmem:[%s287 + $0x20] sm:$0xff]
        %v380 = vld [vmem:[%s287 + $0x28] sm:$0xff]
        %v381 = vld [vmem:[%s287 + $0x30] sm:$0xff]
        %v382 = vld [vmem:[%s287 + $0x38] sm:$0xff]
        %v383 = vld [vmem:[%s287 + $0x40] sm:$0xff]
        %v384 = vld [vmem:[%s287 + $0x48] sm:$0xff]
        %v385 = vld [vmem:[%s287 + $0x50] sm:$0xff]
        %v386 = vld [vmem:[%s287 + $0x58] sm:$0xff]
        %v387 = vld [vmem:[%s287 + $0x60] sm:$0xff]
        %v388 = vld [vmem:[%s287 + $0x68] sm:$0xff]
        %v389 = vld [vmem:[%s287 + $0x70] sm:$0xff]
        %v390 = vld [vmem:[%s287 + $0x78] sm:$0xff]
        %v391 = vld [vmem:[%s296] sm:$0xff]
        %v392 = vld [vmem:[%s296 + $0x8] sm:$0xff]
        %v393 = vld [vmem:[%s296 + $0x10] sm:$0xff]
        %v394 = vld [vmem:[%s296 + $0x18] sm:$0xff]
        %v395 = vld [vmem:[%s296 + $0x20] sm:$0xff]
        %v396 = vld [vmem:[%s296 + $0x28] sm:$0xff]
        %v397 = vld [vmem:[%s296 + $0x30] sm:$0xff]
        %v398 = vld [vmem:[%s296 + $0x38] sm:$0xff]
        %v399 = vld [vmem:[%s296 + $0x40] sm:$0xff]
        %v400 = vld [vmem:[%s296 + $0x48] sm:$0xff]
        %v401 = vld [vmem:[%s296 + $0x50] sm:$0xff]
        %v402 = vld [vmem:[%s296 + $0x58] sm:$0xff]
        %v403 = vld [vmem:[%s296 + $0x60] sm:$0xff]
        %v404 = vld [vmem:[%s296 + $0x68] sm:$0xff]
        %v405 = vld [vmem:[%s296 + $0x70] sm:$0xff]
        %v406 = vld [vmem:[%s296 + $0x78] sm:$0xff]
        %v407 = vld [vmem:[%s296 + $0x80] sm:$0xff]
        %v408 = vld [vmem:[%s296 + $0x88] sm:$0xff]
        %v409 = vld [vmem:[%s296 + $0x90] sm:$0xff]
        %v410 = vld [vmem:[%s296 + $0x98] sm:$0xff]
        %v411 = vld [vmem:[%s296 + $0xa0] sm:$0xff]
        %v412 = vld [vmem:[%s296 + $0xa8] sm:$0xff]
        %v413 = vld [vmem:[%s296 + $0xb0] sm:$0xff]
        %v414 = vld [vmem:[%s296 + $0xb8] sm:$0xff]
        %v415 = vld [vmem:[%s296 + $0xc0] sm:$0xff]
        %v416 = vld [vmem:[%s296 + $0xc8] sm:$0xff]
        %v417 = vld [vmem:[%s296 + $0xd0] sm:$0xff]
        %v418 = vld [vmem:[%s296 + $0xd8] sm:$0xff]
        %v419 = vld [vmem:[%s296 + $0xe0] sm:$0xff]
        %v420 = vld [vmem:[%s296 + $0xe8] sm:$0xff]
        %v421 = vld [vmem:[%s296 + $0xf0] sm:$0xff]
        %v422 = vld [vmem:[%s296 + $0xf8] sm:$0xff]
        %v423 = vld [vmem:[%s351] sm:$0x3]
        %v425 = vlaneseq
        %v426 = vshrl.u32 %v425, 7
        %v427 = vsub.s32 0, %v426
        %v428 = vrot.slane %v423, %v427
        %v429 = vlaneseq
        %v430 = vshrl.u32 %v429, 7
        %v431 = vsub.s32 1, %v430
        %v432 = vrot.slane %v423, %v431
        %435 = vmatprep.subr.mxu0 %v392
        %436 = vmatpush1.msra.mxu0 %v391
        %437 = vmatprep.subr.mxu0 %v394
        %438 = vmatpush1.msra.mxu0 %v393
        %439 = vmatprep.subr.mxu0 %v396
        %440 = vmatpush1.msra.mxu0 %v395
        %441 = vmatprep.subr.mxu0 %v398
        %442 = vmatpush1.msra.mxu0 %v397
        %443 = vmatprep.subr.mxu0 %v400
        %444 = vmatpush1.msra.mxu0 %v399
        %445 = vmatprep.subr.mxu0 %v402
        %446 = vmatpush1.msra.mxu0 %v401
        %447 = vmatprep.subr.mxu0 %v404
        %448 = vmatpush1.msra.mxu0 %v403
        %449 = vmatprep.subr.mxu0 %v406
        %450 = vmatpush1.msra.mxu0 %v405
        %451 = vmatprep.subr.mxu0 %v408
        %452 = vmatpush1.msra.mxu0 %v407
        %453 = vmatprep.subr.mxu0 %v410
        %454 = vmatpush1.msra.mxu0 %v409
        %455 = vmatprep.subr.mxu0 %v412
        %456 = vmatpush1.msra.mxu0 %v411
        %457 = vmatprep.subr.mxu0 %v414
        %458 = vmatpush1.msra.mxu0 %v413
        %459 = vmatprep.subr.mxu0 %v416
        %460 = vmatpush1.msra.mxu0 %v415
        %461 = vmatprep.subr.mxu0 %v418
        %462 = vmatpush1.msra.mxu0 %v417
        %463 = vmatprep.subr.mxu0 %v420
        %464 = vmatpush1.msra.mxu0 %v419
        %465 = vmatprep.subr.mxu0 %v422
        %466 = vmatpush1.msra.mxu0 %v421
        %467 = vmatprep.subr.mxu0 0.0
        %468 = vmatpush1.msra.mxu0 0.0
        %469 = vmatprep.subr.mxu0 0.0
        %470 = vmatpush1.msra.mxu0 0.0
        %471 = vmatprep.subr.mxu0 0.0
        %472 = vmatpush1.msra.mxu0 0.0
        %473 = vmatprep.subr.mxu0 0.0
        %474 = vmatpush1.msra.mxu0 0.0
        %475 = vmatprep.subr.mxu0 0.0
        %476 = vmatpush1.msra.mxu0 0.0
        %477 = vmatprep.subr.mxu0 0.0
        %478 = vmatpush1.msra.mxu0 0.0
        %479 = vmatprep.subr.mxu0 0.0
        %480 = vmatpush1.msra.mxu0 0.0
        %481 = vmatprep.subr.mxu0 0.0
        %482 = vmatpush1.msra.mxu0 0.0
        %483 = vmatprep.subr.mxu0 0.0
        %484 = vmatpush1.msra.mxu0 0.0
        %485 = vmatprep.subr.mxu0 0.0
        %486 = vmatpush1.msra.mxu0 0.0
        %487 = vmatprep.subr.mxu0 0.0
        %488 = vmatpush1.msra.mxu0 0.0
        %489 = vmatprep.subr.mxu0 0.0
        %490 = vmatpush1.msra.mxu0 0.0
        %491 = vmatprep.subr.mxu0 0.0
        %492 = vmatpush1.msra.mxu0 0.0
        %493 = vmatprep.subr.mxu0 0.0
        %494 = vmatpush1.msra.mxu0 0.0
        %495 = vmatprep.subr.mxu0 0.0
        %496 = vmatpush1.msra.mxu0 0.0
        %497 = vmatprep.subr.mxu0 0.0
        %498 = vmatpush1.msra.mxu0 0.0
        %499 = vmatprep.mubr.f32.mxu0 0.0
        %500 = vmatmul.mubr.f32.gmra.mrb[0].mxu0 %v375
        %v501 = vpop.f32.mrb[0].mxu0
        %v502 = vadd.f32 %v428, %v501
        %v503 = vpop.f32.mrb[0].mxu0
        %v504 = vadd.f32 %v432, %v503
        %505 = vmatprep.mubr.f32.mxu0 0.0
        %506 = vmatmul.mubr.f32.gmra.mrb[0].mxu0 %v376
        %v507 = vpop.f32.mrb[0].mxu0
        %v508 = vadd.f32 %v428, %v507
        %v509 = vpop.f32.mrb[0].mxu0
        %v510 = vadd.f32 %v432, %v509
        %511 = vmatprep.mubr.f32.mxu0 0.0
        %512 = vmatmul.mubr.f32.gmra.mrb[0].mxu0 %v377
        %v513 = vpop.f32.mrb[0].mxu0
        %v514 = vadd.f32 %v428, %v513
        %v515 = vpop.f32.mrb[0].mxu0
        %v516 = vadd.f32 %v432, %v515
        %517 = vmatprep.mubr.f32.mxu0 0.0
        %518 = vmatmul.mubr.f32.gmra.mrb[0].mxu0 %v378
        %v519 = vpop.f32.mrb[0].mxu0
        %v520 = vadd.f32 %v428, %v519
        %v521 = vpop.f32.mrb[0].mxu0
        %v522 = vadd.f32 %v432, %v521
        %523 = vmatprep.mubr.f32.mxu0 0.0
        %524 = vmatmul.mubr.f32.gmra.mrb[0].mxu0 %v379
        %v525 = vpop.f32.mrb[0].mxu0
        %v526 = vadd.f32 %v428, %v525
        %v527 = vpop.f32.mrb[0].mxu0
        %v528 = vadd.f32 %v432, %v527
        %529 = vmatprep.mubr.f32.mxu0 0.0
        %530 = vmatmul.mubr.f32.gmra.mrb[0].mxu0 %v380
        %v531 = vpop.f32.mrb[0].mxu0
        %v532 = vadd.f32 %v428, %v531
        %v533 = vpop.f32.mrb[0].mxu0
        %v534 = vadd.f32 %v432, %v533
        %535 = vmatprep.mubr.f32.mxu0 0.0
        %536 = vmatmul.mubr.f32.gmra.mrb[0].mxu0 %v381
        %v537 = vpop.f32.mrb[0].mxu0
        %v538 = vadd.f32 %v428, %v537
        %v539 = vpop.f32.mrb[0].mxu0
        %v540 = vadd.f32 %v432, %v539
        %541 = vmatprep.mubr.f32.mxu0 0.0
        %542 = vmatmul.mubr.f32.gmra.mrb[0].mxu0 %v382
        %v543 = vpop.f32.mrb[0].mxu0
        %v544 = vadd.f32 %v428, %v543
        %v545 = vpop.f32.mrb[0].mxu0
        %v546 = vadd.f32 %v432, %v545
        %547 = vmatprep.mubr.f32.mxu0 0.0
        %548 = vmatmul.mubr.f32.gmra.mrb[0].mxu0 %v383
        %v549 = vpop.f32.mrb[0].mxu0
        %v550 = vadd.f32 %v428, %v549
        %v551 = vpop.f32.mrb[0].mxu0
        %v552 = vadd.f32 %v432, %v551
        %553 = vmatprep.mubr.f32.mxu0 0.0
        %554 = vmatmul.mubr.f32.gmra.mrb[0].mxu0 %v384
        %v555 = vpop.f32.mrb[0].mxu0
        %v556 = vadd.f32 %v428, %v555
        %v557 = vpop.f32.mrb[0].mxu0
        %v558 = vadd.f32 %v432, %v557
        %559 = vmatprep.mubr.f32.mxu0 0.0
        %560 = vmatmul.mubr.f32.gmra.mrb[0].mxu0 %v385
        %v561 = vpop.f32.mrb[0].mxu0
        %v562 = vadd.f32 %v428, %v561
        %v563 = vpop.f32.mrb[0].mxu0
        %v564 = vadd.f32 %v432, %v563
        %565 = vmatprep.mubr.f32.mxu0 0.0
        %566 = vmatmul.mubr.f32.gmra.mrb[0].mxu0 %v386
        %v567 = vpop.f32.mrb[0].mxu0
        %v568 = vadd.f32 %v428, %v567
        %v569 = vpop.f32.mrb[0].mxu0
        %v570 = vadd.f32 %v432, %v569
        %571 = vmatprep.mubr.f32.mxu0 0.0
        %572 = vmatmul.mubr.f32.gmra.mrb[0].mxu0 %v387
        %v573 = vpop.f32.mrb[0].mxu0
        %v574 = vadd.f32 %v428, %v573
        %v575 = vpop.f32.mrb[0].mxu0
        %v576 = vadd.f32 %v432, %v575
        %577 = vmatprep.mubr.f32.mxu0 0.0
        %578 = vmatmul.mubr.f32.gmra.mrb[0].mxu0 %v388
        %v579 = vpop.f32.mrb[0].mxu0
        %v580 = vadd.f32 %v428, %v579
        %v581 = vpop.f32.mrb[0].mxu0
        %v582 = vadd.f32 %v432, %v581
        %583 = vmatprep.mubr.f32.mxu0 0.0
        %584 = vmatmul.mubr.f32.gmra.mrb[0].mxu0 %v389
        %v585 = vpop.f32.mrb[0].mxu0
        %v586 = vadd.f32 %v428, %v585
        %v587 = vpop.f32.mrb[0].mxu0
        %v588 = vadd.f32 %v432, %v587
        %589 = vmatprep.mubr.f32.mxu0 0.0
        %590 = vmatmul.mubr.f32.gmra.mrb[0].mxu0 %v390
        %v591 = vpop.f32.mrb[0].mxu0
        %v592 = vadd.f32 %v428, %v591
        %v593 = vpop.f32.mrb[0].mxu0
        %v594 = vadd.f32 %v432, %v593
        %595 = vdwg.mxu0
        %v596 = vmax.f32 %v502, 0.0
        %v597 = vmax.f32 %v504, 0.0
        %v598 = vmax.f32 %v508, 0.0
        %v599 = vmax.f32 %v510, 0.0
        %v600 = vmax.f32 %v514, 0.0
        %v601 = vmax.f32 %v516, 0.0
        %v602 = vmax.f32 %v520, 0.0
        %v603 = vmax.f32 %v522, 0.0
        %v604 = vmax.f32 %v526, 0.0
        %v605 = vmax.f32 %v528, 0.0
        %v606 = vmax.f32 %v532, 0.0
        %v607 = vmax.f32 %v534, 0.0
        %v608 = vmax.f32 %v538, 0.0
        %v609 = vmax.f32 %v540, 0.0
        %v610 = vmax.f32 %v544, 0.0
        %v611 = vmax.f32 %v546, 0.0
        %v612 = vmax.f32 %v550, 0.0
        %v613 = vmax.f32 %v552, 0.0
        %v614 = vmax.f32 %v556, 0.0
        %v615 = vmax.f32 %v558, 0.0
        %v616 = vmax.f32 %v562, 0.0
        %v617 = vmax.f32 %v564, 0.0
        %v618 = vmax.f32 %v568, 0.0
        %v619 = vmax.f32 %v570, 0.0
        %v620 = vmax.f32 %v574, 0.0
        %v621 = vmax.f32 %v576, 0.0
        %v622 = vmax.f32 %v580, 0.0
        %v623 = vmax.f32 %v582, 0.0
        %v624 = vmax.f32 %v586, 0.0
        %v625 = vmax.f32 %v588, 0.0
        %v626 = vmax.f32 %v592, 0.0
        %v627 = vmax.f32 %v594, 0.0
        %v628 = vld [vmem:[#allocation2] sm:$0xff]
        %v629 = vld [vmem:[#allocation2 + $0x8] sm:$0xff]
        %v630 = vld [vmem:[#allocation2 + $0x10] sm:$0xff]
        %v631 = vld [vmem:[#allocation2 + $0x18] sm:$0xff]
        %v632 = vld [vmem:[#allocation2 + $0x20] sm:$0xff]
        %v633 = vld [vmem:[#allocation2 + $0x28] sm:$0xff]
        %v634 = vld [vmem:[#allocation2 + $0x30] sm:$0xff]
        %v635 = vld [vmem:[#allocation2 + $0x38] sm:$0xff]
        %v636 = vld [vmem:[#allocation2 + $0x40] sm:$0xff]
        %v637 = vld [vmem:[#allocation2 + $0x48] sm:$0xff]
        %v638 = vld [vmem:[#allocation2 + $0x50] sm:$0xff]
        %v639 = vld [vmem:[#allocation2 + $0x58] sm:$0xff]
        %v640 = vld [vmem:[#allocation2 + $0x60] sm:$0xff]
        %v641 = vld [vmem:[#allocation2 + $0x68] sm:$0xff]
        %v642 = vld [vmem:[#allocation2 + $0x70] sm:$0xff]
        %v643 = vld [vmem:[#allocation2 + $0x78] sm:$0xff]
        %v644 = vld [vmem:[%s305] sm:$0xff]
        %v645 = vld [vmem:[%s305 + $0x8] sm:$0xff]
        %v646 = vld [vmem:[%s305 + $0x10] sm:$0xff]
        %v647 = vld [vmem:[%s305 + $0x18] sm:$0xff]
        %v648 = vld [vmem:[%s305 + $0x20] sm:$0xff]
        %v649 = vld [vmem:[%s305 + $0x28] sm:$0xff]
        %v650 = vld [vmem:[%s305 + $0x30] sm:$0xff]
        %v651 = vld [vmem:[%s305 + $0x38] sm:$0xff]
        %v652 = vld [vmem:[%s305 + $0x40] sm:$0xff]
        %v653 = vld [vmem:[%s305 + $0x48] sm:$0xff]
        %v654 = vld [vmem:[%s305 + $0x50] sm:$0xff]
        %v655 = vld [vmem:[%s305 + $0x58] sm:$0xff]
        %v656 = vld [vmem:[%s305 + $0x60] sm:$0xff]
        %v657 = vld [vmem:[%s305 + $0x68] sm:$0xff]
        %v658 = vld [vmem:[%s305 + $0x70] sm:$0xff]
        %v659 = vld [vmem:[%s305 + $0x78] sm:$0xff]
        %v660 = vld [vmem:[%s305 + $0x80] sm:$0xff]
        %v661 = vld [vmem:[%s305 + $0x88] sm:$0xff]
        %v662 = vld [vmem:[%s305 + $0x90] sm:$0xff]
        %v663 = vld [vmem:[%s305 + $0x98] sm:$0xff]
        %v664 = vld [vmem:[%s305 + $0xa0] sm:$0xff]
        %v665 = vld [vmem:[%s305 + $0xa8] sm:$0xff]
        %v666 = vld [vmem:[%s305 + $0xb0] sm:$0xff]
        %v667 = vld [vmem:[%s305 + $0xb8] sm:$0xff]
        %v668 = vld [vmem:[%s305 + $0xc0] sm:$0xff]
        %v669 = vld [vmem:[%s305 + $0xc8] sm:$0xff]
        %v670 = vld [vmem:[%s305 + $0xd0] sm:$0xff]
        %v671 = vld [vmem:[%s305 + $0xd8] sm:$0xff]
        %v672 = vld [vmem:[%s305 + $0xe0] sm:$0xff]
        %v673 = vld [vmem:[%s305 + $0xe8] sm:$0xff]
        %v674 = vld [vmem:[%s305 + $0xf0] sm:$0xff]
        %v675 = vld [vmem:[%s305 + $0xf8] sm:$0xff]
        %676 = vmatprep.subr.mxu0 0.0
        %677 = vmatpush1.msra.mxu0 %v644
        %678 = vmatprep.subr.mxu0 0.0
        %679 = vmatpush1.msra.mxu0 %v645
        %680 = vmatprep.subr.mxu0 0.0
        %681 = vmatpush1.msra.mxu0 %v646
        %682 = vmatprep.subr.mxu0 0.0
        %683 = vmatpush1.msra.mxu0 %v647
        %684 = vmatprep.subr.mxu0 0.0
        %685 = vmatpush1.msra.mxu0 %v648
        %686 = vmatprep.subr.mxu0 0.0
        %687 = vmatpush1.msra.mxu0 %v649
        %688 = vmatprep.subr.mxu0 0.0
        %689 = vmatpush1.msra.mxu0 %v650
        %690 = vmatprep.subr.mxu0 0.0
        %691 = vmatpush1.msra.mxu0 %v651
        %692 = vmatprep.subr.mxu0 0.0
        %693 = vmatpush1.msra.mxu0 %v652
        %694 = vmatprep.subr.mxu0 0.0
        %695 = vmatpush1.msra.mxu0 %v653
        %696 = vmatprep.subr.mxu0 0.0
        %697 = vmatpush1.msra.mxu0 %v654
        %698 = vmatprep.subr.mxu0 0.0
        %699 = vmatpush1.msra.mxu0 %v655
        %700 = vmatprep.subr.mxu0 0.0
        %701 = vmatpush1.msra.mxu0 %v656
        %702 = vmatprep.subr.mxu0 0.0
        %703 = vmatpush1.msra.mxu0 %v657
        %704 = vmatprep.subr.mxu0 0.0
        %705 = vmatpush1.msra.mxu0 %v658
        %706 = vmatprep.subr.mxu0 0.0
        %707 = vmatpush1.msra.mxu0 %v659
        %708 = vmatprep.subr.mxu0 0.0
        %709 = vmatpush1.msra.mxu0 %v660
        %710 = vmatprep.subr.mxu0 0.0
        %711 = vmatpush1.msra.mxu0 %v661
        %712 = vmatprep.subr.mxu0 0.0
        %713 = vmatpush1.msra.mxu0 %v662
        %714 = vmatprep.subr.mxu0 0.0
        %715 = vmatpush1.msra.mxu0 %v663
        %716 = vmatprep.subr.mxu0 0.0
        %717 = vmatpush1.msra.mxu0 %v664
        %718 = vmatprep.subr.mxu0 0.0
        %719 = vmatpush1.msra.mxu0 %v665
        %720 = vmatprep.subr.mxu0 0.0
        %721 = vmatpush1.msra.mxu0 %v666
        %722 = vmatprep.subr.mxu0 0.0
        %723 = vmatpush1.msra.mxu0 %v667
        %724 = vmatprep.subr.mxu0 0.0
        %725 = vmatpush1.msra.mxu0 %v668
        %726 = vmatprep.subr.mxu0 0.0
        %727 = vmatpush1.msra.mxu0 %v669
        %728 = vmatprep.subr.mxu0 0.0
        %729 = vmatpush1.msra.mxu0 %v670
        %730 = vmatprep.subr.mxu0 0.0
        %731 = vmatpush1.msra.mxu0 %v671
        %732 = vmatprep.subr.mxu0 0.0
        %733 = vmatpush1.msra.mxu0 %v672
        %734 = vmatprep.subr.mxu0 0.0
        %735 = vmatpush1.msra.mxu0 %v673
        %736 = vmatprep.subr.mxu0 0.0
        %737 = vmatpush1.msra.mxu0 %v674
        %738 = vmatprep.subr.mxu0 0.0
        %739 = vmatpush1.msra.mxu0 %v675
        %740 = vmatprep.mubr.f32.mxu0 %v597
        %741 = vmatmul.mubr.f32.gmra.mrb[0].mxu0 %v596
        %v742 = vpop.f32.mrb[0].mxu0
        %v743 = vadd.f32 0.0, %v742
        %v744 = vpop.f32.mrb[0].mxu0
        %745 = vmatprep.mubr.f32.mxu0 %v599
        %746 = vmatmul.mubr.f32.gmra.mrb[0].mxu0 %v598
        %v747 = vpop.f32.mrb[0].mxu0
        %v748 = vadd.f32 0.0, %v747
        %v749 = vpop.f32.mrb[0].mxu0
        %750 = vmatprep.mubr.f32.mxu0 %v601
        %751 = vmatmul.mubr.f32.gmra.mrb[0].mxu0 %v600
        %v752 = vpop.f32.mrb[0].mxu0
        %v753 = vadd.f32 0.0, %v752
        %v754 = vpop.f32.mrb[0].mxu0
        %755 = vmatprep.mubr.f32.mxu0 %v603
        %756 = vmatmul.mubr.f32.gmra.mrb[0].mxu0 %v602
        %v757 = vpop.f32.mrb[0].mxu0
        %v758 = vadd.f32 0.0, %v757
        %v759 = vpop.f32.mrb[0].mxu0
        %760 = vmatprep.mubr.f32.mxu0 %v605
        %761 = vmatmul.mubr.f32.gmra.mrb[0].mxu0 %v604
        %v762 = vpop.f32.mrb[0].mxu0
        %v763 = vadd.f32 0.0, %v762
        %v764 = vpop.f32.mrb[0].mxu0
        %765 = vmatprep.mubr.f32.mxu0 %v607
        %766 = vmatmul.mubr.f32.gmra.mrb[0].mxu0 %v606
        %v767 = vpop.f32.mrb[0].mxu0
        %v768 = vadd.f32 0.0, %v767
        %v769 = vpop.f32.mrb[0].mxu0
        %770 = vmatprep.mubr.f32.mxu0 %v609
        %771 = vmatmul.mubr.f32.gmra.mrb[0].mxu0 %v608
        %v772 = vpop.f32.mrb[0].mxu0
        %v773 = vadd.f32 0.0, %v772
        %v774 = vpop.f32.mrb[0].mxu0
        %775 = vmatprep.mubr.f32.mxu0 %v611
        %776 = vmatmul.mubr.f32.gmra.mrb[0].mxu0 %v610
        %v777 = vpop.f32.mrb[0].mxu0
        %v778 = vadd.f32 0.0, %v777
        %v779 = vpop.f32.mrb[0].mxu0
        %780 = vmatprep.mubr.f32.mxu0 %v613
        %781 = vmatmul.mubr.f32.gmra.mrb[0].mxu0 %v612
        %v782 = vpop.f32.mrb[0].mxu0
        %v783 = vadd.f32 0.0, %v782
        %v784 = vpop.f32.mrb[0].mxu0
        %785 = vmatprep.mubr.f32.mxu0 %v615
        %786 = vmatmul.mubr.f32.gmra.mrb[0].mxu0 %v614
        %v787 = vpop.f32.mrb[0].mxu0
        %v788 = vadd.f32 0.0, %v787
        %v789 = vpop.f32.mrb[0].mxu0
        %790 = vmatprep.mubr.f32.mxu0 %v617
        %791 = vmatmul.mubr.f32.gmra.mrb[0].mxu0 %v616
        %v792 = vpop.f32.mrb[0].mxu0
        %v793 = vadd.f32 0.0, %v792
        %v794 = vpop.f32.mrb[0].mxu0
        %795 = vmatprep.mubr.f32.mxu0 %v619
        %796 = vmatmul.mubr.f32.gmra.mrb[0].mxu0 %v618
        %v797 = vpop.f32.mrb[0].mxu0
        %v798 = vadd.f32 0.0, %v797
        %v799 = vpop.f32.mrb[0].mxu0
        %800 = vmatprep.mubr.f32.mxu0 %v621
        %801 = vmatmul.mubr.f32.gmra.mrb[0].mxu0 %v620
        %v802 = vpop.f32.mrb[0].mxu0
        %v803 = vadd.f32 0.0, %v802
        %v804 = vpop.f32.mrb[0].mxu0
        %805 = vmatprep.mubr.f32.mxu0 %v623
        %806 = vmatmul.mubr.f32.gmra.mrb[0].mxu0 %v622
        %v807 = vpop.f32.mrb[0].mxu0
        %v808 = vadd.f32 0.0, %v807
        %v809 = vpop.f32.mrb[0].mxu0
        %810 = vmatprep.mubr.f32.mxu0 %v625
        %811 = vmatmul.mubr.f32.gmra.mrb[0].mxu0 %v624
        %v812 = vpop.f32.mrb[0].mxu0
        %v813 = vadd.f32 0.0, %v812
        %v814 = vpop.f32.mrb[0].mxu0
        %815 = vmatprep.mubr.f32.mxu0 %v627
        %816 = vmatmul.mubr.f32.gmra.mrb[0].mxu0 %v626
        %v817 = vpop.f32.mrb[0].mxu0
        %v818 = vadd.f32 0.0, %v817
        %v819 = vpop.f32.mrb[0].mxu0
        %820 = vdwg.mxu0
        %v821 = vadd.f32 %v628, %v743
        %v822 = vadd.f32 %v629, %v748
        %v823 = vadd.f32 %v630, %v753
        %v824 = vadd.f32 %v631, %v758
        %v825 = vadd.f32 %v632, %v763
        %v826 = vadd.f32 %v633, %v768
        %v827 = vadd.f32 %v634, %v773
        %v828 = vadd.f32 %v635, %v778
        %v829 = vadd.f32 %v636, %v783
        %v830 = vadd.f32 %v637, %v788
        %v831 = vadd.f32 %v638, %v793
        %v832 = vadd.f32 %v639, %v798
        %v833 = vadd.f32 %v640, %v803
        %v834 = vadd.f32 %v641, %v808
        %v835 = vadd.f32 %v642, %v813
        %v836 = vadd.f32 %v643, %v818
        %837 = vst [vmem:[#allocation2] sm:$0xff] %v821
        %838 = vst [vmem:[#allocation2 + $0x8] sm:$0xff] %v822
        %839 = vst [vmem:[#allocation2 + $0x10] sm:$0xff] %v823
        %840 = vst [vmem:[#allocation2 + $0x18] sm:$0xff] %v824
        %841 = vst [vmem:[#allocation2 + $0x20] sm:$0xff] %v825
        %842 = vst [vmem:[#allocation2 + $0x28] sm:$0xff] %v826
        %843 = vst [vmem:[#allocation2 + $0x30] sm:$0xff] %v827
        %844 = vst [vmem:[#allocation2 + $0x38] sm:$0xff] %v828
        %845 = vst [vmem:[#allocation2 + $0x40] sm:$0xff] %v829
        %846 = vst [vmem:[#allocation2 + $0x48] sm:$0xff] %v830
        %847 = vst [vmem:[#allocation2 + $0x50] sm:$0xff] %v831
        %848 = vst [vmem:[#allocation2 + $0x58] sm:$0xff] %v832
        %849 = vst [vmem:[#allocation2 + $0x60] sm:$0xff] %v833
        %850 = vst [vmem:[#allocation2 + $0x68] sm:$0xff] %v834
        %851 = vst [vmem:[#allocation2 + $0x70] sm:$0xff] %v835
        %852 = vst [vmem:[#allocation2 + $0x78] sm:$0xff] %v836
        %p853 = scmp.eq.s32.totalorder %s30, 1
        // Predicated region
        $region57: #{tpu_custom_call.1} parent=39 // pred_check
          %p854 = pneg %p853
        $region58: #{tpu_custom_call.1} parent=39 // pred_check_branch
          %856 = sbr.rel (%p854) target = $region60
        $region59: #{tpu_custom_call.1} parent=39 // pred_region
          %v857 = vld [vmem:[#allocation2] sm:$0xff]
          %v858 = vld [vmem:[#allocation2 + $0x8] sm:$0xff]
          %v859 = vld [vmem:[#allocation2 + $0x10] sm:$0xff]
          %v860 = vld [vmem:[#allocation2 + $0x18] sm:$0xff]
          %v861 = vld [vmem:[#allocation2 + $0x20] sm:$0xff]
          %v862 = vld [vmem:[#allocation2 + $0x28] sm:$0xff]
          %v863 = vld [vmem:[#allocation2 + $0x30] sm:$0xff]
          %v864 = vld [vmem:[#allocation2 + $0x38] sm:$0xff]
          %v865 = vld [vmem:[#allocation2 + $0x40] sm:$0xff]
          %v866 = vld [vmem:[#allocation2 + $0x48] sm:$0xff]
          %v867 = vld [vmem:[#allocation2 + $0x50] sm:$0xff]
          %v868 = vld [vmem:[#allocation2 + $0x58] sm:$0xff]
          %v869 = vld [vmem:[#allocation2 + $0x60] sm:$0xff]
          %v870 = vld [vmem:[#allocation2 + $0x68] sm:$0xff]
          %v871 = vld [vmem:[#allocation2 + $0x70] sm:$0xff]
          %v872 = vld [vmem:[#allocation2 + $0x78] sm:$0xff]
          %v873 = vld [vmem:[%s4] sm:$0x1]
          %v875 = vlaneseq
          %v876 = vshrl.u32 %v875, 7
          %v877 = vsub.s32 0, %v876
          %v878 = vrot.slane %v873, %v877
          %v880 = vadd.f32 %v857, %v878
          %v881 = vadd.f32 %v858, %v878
          %v882 = vadd.f32 %v859, %v878
          %v883 = vadd.f32 %v860, %v878
          %v884 = vadd.f32 %v861, %v878
          %v885 = vadd.f32 %v862, %v878
          %v886 = vadd.f32 %v863, %v878
          %v887 = vadd.f32 %v864, %v878
          %v888 = vadd.f32 %v865, %v878
          %v889 = vadd.f32 %v866, %v878
          %v890 = vadd.f32 %v867, %v878
          %v891 = vadd.f32 %v868, %v878
          %v892 = vadd.f32 %v869, %v878
          %v893 = vadd.f32 %v870, %v878
          %v894 = vadd.f32 %v871, %v878
          %v895 = vadd.f32 %v872, %v878
          %896 = vst [vmem:[%s345] sm:$0xff] %v880
          %897 = vst [vmem:[%s345 + $0x8] sm:$0xff] %v881
          %898 = vst [vmem:[%s345 + $0x10] sm:$0xff] %v882
          %899 = vst [vmem:[%s345 + $0x18] sm:$0xff] %v883
          %900 = vst [vmem:[%s345 + $0x20] sm:$0xff] %v884
          %901 = vst [vmem:[%s345 + $0x28] sm:$0xff] %v885
          %902 = vst [vmem:[%s345 + $0x30] sm:$0xff] %v886
          %903 = vst [vmem:[%s345 + $0x38] sm:$0xff] %v887
          %904 = vst [vmem:[%s345 + $0x40] sm:$0xff] %v888
          %905 = vst [vmem:[%s345 + $0x48] sm:$0xff] %v889
          %906 = vst [vmem:[%s345 + $0x50] sm:$0xff] %v890
          %907 = vst [vmem:[%s345 + $0x58] sm:$0xff] %v891
          %908 = vst [vmem:[%s345 + $0x60] sm:$0xff] %v892
          %909 = vst [vmem:[%s345 + $0x68] sm:$0xff] %v893
          %910 = vst [vmem:[%s345 + $0x70] sm:$0xff] %v894
          %911 = vst [vmem:[%s345 + $0x78] sm:$0xff] %v895
        $region60: #{tpu_custom_call.1} parent=39 // pred_fallthru
          _
        %s912 = sand.u32 %s170, 1
        %s913 = scalar_lea.sflag [#allocation5], %s912
        %s914 = sand.u32 %s170, 1
        %s915 = smul.addr %s914, 128
        %s916 = scalar_lea.vmem [#allocation9], %s915
        // Predicated region
        $region61: #{tpu_custom_call.1} parent=39 // pred_check
          %p917 = pneg %p180
        $region62: #{tpu_custom_call.1} parent=39 // pred_check_branch
          %919 = sbr.rel (%p917) target = $region64
        $region63: #{tpu_custom_call.1} parent=39 // pred_region
          %s920 = smul.u32 16, %s29
          %s922 = ssub.s32 2048, 2048
          %923 = vsyncadd %s913, %s922
          %s924 = smul.addr %s920, 128
          %s925 = scalar_lea.hbm %s5, %s924
          %s926 = sshll.u32 %s916, 4
          %s927 = int_to_ptr.vmem [resolvable:$true] %s926
          %932 = dma.vmem_to_hbm [thread:$0]  %s927, 2048, %s925, %s913, 128, 128, 8
        $region64: #{tpu_custom_call.1} parent=39 // pred_fallthru
          _
      $region40: #{tpu_custom_call.1} parent=5 // pred_fallthru
        _
      %p933 = scmp.le.s32.totalorder 2, %s20
      // Predicated region
      $region65: #{tpu_custom_call.1} parent=5 // pred_check
        %p934 = pneg %p933
      $region66: #{tpu_custom_call.1} parent=5 // pred_check_branch
        %936 = sbr.rel (%p934) target = $region68
      $region67: #{tpu_custom_call.1} parent=5 // pred_region
        %s937 = ssub.s32 %s20, 2
        // Predicated region
        $region69: #{tpu_custom_call.1} parent=67 // pred_check
          %p938 = pneg %p186
        $region70: #{tpu_custom_call.1} parent=67 // pred_check_branch
          %940 = sbr.rel (%p938) target = $region72
        $region71: #{tpu_custom_call.1} parent=67 // pred_region
          %s941 = sand.u32 %s171, 1
          %s942 = scalar_lea.sflag [#allocation5], %s941
          %s943 = sand.u32 %s171, 1
          %s944 = smul.addr %s943, 128
          %s945 = scalar_lea.vmem [#allocation9], %s944
          %946 = dma.done %s942, 2048
        $region72: #{tpu_custom_call.1} parent=67 // pred_fallthru
          _
      $region68: #{tpu_custom_call.1} parent=5 // pred_fallthru
        _
    $region6: #{tpu_custom_call.1} parent=1 // loop_footer
      %s24 = sadd.s32 1, %s20
    $region7: #{tpu_custom_call.1} parent=1 // loop_footer_branch
      %19 = sbr.rel target = $region3
    $region8: #{tpu_custom_call.1} parent=1 // loop_exit
      _
    %947 = vsyncpa [#allocation4], 1
    %s948 = scalar_lea.sflag [#allocation4], 1
    %949 = vsyncpa %s948, 1
    %950 = vsyncpa [#allocation7], 1
    %s951 = scalar_lea.sflag [#allocation7], 1
    %952 = vsyncpa %s951, 1
    %953 = vsyncpa [#allocation5], 1
    %s954 = scalar_lea.sflag [#allocation5], 1
    %955 = vsyncpa %s954, 1

</llo_original>
